<compile_context>
chip_gen: v7x
topology: tpu7x:2x2x1
jax: 0.10.0
libtpu: 0.0.40
codegen_flags: <defaults>
</compile_context>

<pallas_src>
import functools
import numpy as np

import jax
import jax.numpy as jnp
from jax.experimental import pallas as pl
from jax.experimental.pallas import tpu as pltpu


# --------------------------------------------------------------------------
# fused kernel: ADD loss (B-tile at a time) + confidence BCE
# --------------------------------------------------------------------------
def _fused_loss_kernel(class_idx_ref,   # (B_pad,)   int32 SMEM (scalar prefetch)
                       verts_ref,       # (C, 3, V)  f32 VMEM  — resident model library
                       packed_ref,      # (TB, 16)   f32 VMEM  — [tp(3),qp(4),tg(3),qg(4),has,cnt]
                       conf_ref,        # (TB, Np)   f32 VMEM  — confidence logits tile
                       out_ref,         # (3,)       f32 SMEM  — [total, add, conf]
                       gather_ref,      # (TB, 3, V) f32 VMEM scratch
                       acc_ref,         # (2,)       f32 SMEM scratch — [add_sum, bce_sum]
                       *, add_weight, conf_weight, b_real, n_real, tb):
    i = pl.program_id(0)

    @pl.when(i == 0)
    def _():
        acc_ref[0] = 0.0
        acc_ref[1] = 0.0

    base = i * tb

    # Per-sample model gather: leading-dim dynamic VMEM->VMEM slab copies only
    # (no data-dependent HBM DMA, no lane/sublane-dynamic addressing).
    @pl.loop(0, tb)
    def _(b):
        idx = class_idx_ref[base + b]
        gather_ref[b] = verts_ref[idx]

    vall = gather_ref[...]                 # (TB, 3, V)
    vx = vall[:, 0, :]                     # (TB, V) — B on sublanes, V on lanes
    vy = vall[:, 1, :]
    vz = vall[:, 2, :]

    def col(j):                            # (TB, 1) column slice
        return packed_ref[:, j:j + 1]

    tpx, tpy, tpz = col(0), col(1), col(2)
    wp, xp, yp, zp = col(3), col(4), col(5), col(6)
    tgx, tgy, tgz = col(7), col(8), col(9)
    wg, xg, yg, zg = col(10), col(11), col(12), col(13)
    has_model = col(14)
    cnt_f = col(15)

    def rot_rows(w, x, y, z):
        # rows of the rotation matrix; every entry is a (TB, 1) vector (VPU ops)
        xx, yy, zz = x * x, y * y, z * z
        xy, xz, yz = x * y, x * z, y * z
        wx, wy, wz = w * x, w * y, w * z
        return ((1.0 - 2.0 * (yy + zz), 2.0 * (xy - wz), 2.0 * (xz + wy)),
                (2.0 * (xy + wz), 1.0 - 2.0 * (xx + zz), 2.0 * (yz - wx)),
                (2.0 * (xz - wy), 2.0 * (yz + wx), 1.0 - 2.0 * (xx + yy)))

    Rp = rot_rows(wp, xp, yp, zp)
    Rg = rot_rows(wg, xg, yg, zg)
    dt = (tpx - tgx, tpy - tgy, tpz - tgz)       # (TB, 1) each

    # pred_pts - gt_pts, row k: (Rp[k]-Rg[k]) . v + dt[k], broadcast (TB,1)*(TB,V).
    # Kept on the VPU on purpose — a 3-row contraction cannot fill the MXU.
    def diff_row(k):
        return ((Rp[k][0] - Rg[k][0]) * vx
                + (Rp[k][1] - Rg[k][1]) * vy
                + (Rp[k][2] - Rg[k][2]) * vz
                + dt[k])

    dx = diff_row(0)
    dy = diff_row(1)
    dz = diff_row(2)
    dist = jnp.sqrt(dx * dx + dy * dy + dz * dz)          # (TB, V)

    # masked mean over real vertices: int compare + select (no f32 mask passes)
    lane = jax.lax.broadcasted_iota(jnp.int32, dist.shape, 1)
    cnt_i = cnt_f.astype(jnp.int32)                        # (TB, 1)
    add_model = jnp.sum(jnp.where(lane < cnt_i, dist, 0.0),
                        axis=1, keepdims=True) / cnt_f     # (TB, 1)

    # fallback: F.l1_loss on translation + (1 - |<q_pred, q_gt>|)
    trans = (jnp.abs(dt[0]) + jnp.abs(dt[1]) + jnp.abs(dt[2])) * (1.0 / 3.0)
    qdot = wp * wg + xp * xg + yp * yg + zp * zg
    fallback = trans + (1.0 - jnp.abs(qdot))               # (TB, 1)

    per_sample = jnp.where(has_model > 0.5, add_model, fallback)   # (TB, 1)

    # mask padded batch rows out of the ADD mean
    row = jax.lax.broadcasted_iota(jnp.int32, per_sample.shape, 0) + base
    add_sum = jnp.sum(jnp.where(row < b_real, per_sample, 0.0))

    # BCEWithLogitsLoss with targets == 1, PyTorch-stable formulation:
    #   loss = max(x, 0) - x * y + log1p(exp(-|x|)),  y = 1
    x = conf_ref[...]
    bce = jnp.maximum(x, 0.0) - x + jnp.log1p(jnp.exp(-jnp.abs(x)))
    lane_n = jax.lax.broadcasted_iota(jnp.int32, x.shape, 1)
    row_n = jax.lax.broadcasted_iota(jnp.int32, x.shape, 0) + base
    bce_sum = jnp.sum(jnp.where(jnp.logical_and(lane_n < n_real, row_n < b_real),
                                bce, 0.0))

    acc_ref[0] = acc_ref[0] + add_sum
    acc_ref[1] = acc_ref[1] + bce_sum

    # write every step (cheap scalar ops); values are final on the last step
    avg_add = acc_ref[0] * (1.0 / b_real)
    conf_loss = acc_ref[1] * (1.0 / (b_real * n_real))
    out_ref[0] = add_weight * avg_add + conf_weight * conf_loss
    out_ref[1] = avg_add
    out_ref[2] = conf_loss


def fused_densefusion_loss(class_idx, verts_all, packed, conf,
                           *, add_weight, conf_weight, b_real, n_real, tb):
    """Single pallas_call computing [total, add, conf] losses."""
    b_pad = packed.shape[0]
    n_pad = conf.shape[1]
    C, _, V = verts_all.shape
    num_tiles = b_pad // tb

    kernel = functools.partial(_fused_loss_kernel,
                               add_weight=add_weight, conf_weight=conf_weight,
                               b_real=b_real, n_real=n_real, tb=tb)

    grid_spec = pltpu.PrefetchScalarGridSpec(
        num_scalar_prefetch=1,
        grid=(num_tiles,),
        in_specs=[
            # full model library, constant block index -> fetched once, resident
            pl.BlockSpec((C, 3, V), lambda i, cidx: (0, 0, 0)),
            # packed poses/meta tile and confidence tile, pipelined over B-tiles
            pl.BlockSpec((tb, 16), lambda i, cidx: (i, 0)),
            pl.BlockSpec((tb, n_pad), lambda i, cidx: (i, 0)),
        ],
        out_specs=pl.BlockSpec(memory_space=pltpu.MemorySpace.SMEM),
        scratch_shapes=[
            pltpu.VMEM((tb, 3, V), jnp.float32),   # gathered per-sample models
            pltpu.SMEM((2,), jnp.float32),         # [add_sum, bce_sum] accumulators
        ],
    )

    return pl.pallas_call(
        kernel,
        out_shape=jax.ShapeDtypeStruct((3,), jnp.float32),
        grid_spec=grid_spec,
        compiler_params=pltpu.CompilerParams(
            dimension_semantics=("arbitrary",),          # accumulates across B-tiles
            vmem_limit_bytes=32 * 1024 * 1024),          # safe on v5e/v6e/v7x
    )(class_idx, verts_all, packed, conf)


# --------------------------------------------------------------------------
# module wrapper
# --------------------------------------------------------------------------
class DenseFusionLossPallas:
    """JAX/Pallas port of the DenseFusion training loss (forward only)."""

    def __init__(self, object_models, config=None, add_weight=1.0, conf_weight=0.1,
                 max_class_id=31):
        self.add_weight = float(add_weight)
        self.conf_weight = float(conf_weight)

        model_ids = sorted(object_models.keys())
        C = max(len(model_ids), 1)
        max_n = 1
        for cid in model_ids:
            max_n = max(max_n, int(np.asarray(object_models[cid]['vertices_raw']).shape[0]))
        V = max(128, ((max_n + 127) // 128) * 128)          # lane-aligned, no truncation
        self.V = V
        self.C = C

        verts_all = np.zeros((C, 3, V), dtype=np.float32)   # (model, coord, vertex)
        class_to_idx = np.zeros((max_class_id + 1,), dtype=np.int32)
        class_has_model = np.zeros((max_class_id + 1,), dtype=np.float32)
        class_counts = np.ones((max_class_id + 1,), dtype=np.float32)  # avoid div-by-zero

        for mi, cid in enumerate(model_ids):
            v = np.asarray(object_models[cid]['vertices_raw'], dtype=np.float32)  # (n, 3)
            n = v.shape[0]
            verts_all[mi, :, :n] = v.T
            class_to_idx[cid] = mi
            class_counts[cid] = max(n, 1)
            if n >= 10:                # mirrors the "vertices.shape[0] < 10" fallback
                class_has_model[cid] = 1.0

        self.verts_all = jnp.asarray(verts_all)             # resident (C, 3, V)
        self.class_to_idx = jnp.asarray(class_to_idx)
        self.class_has_model = jnp.asarray(class_has_model)
        self.class_counts = jnp.asarray(class_counts)

        self._jit_loss = jax.jit(self._loss)

    def _loss(self, pred_poses, gt_poses, pred_confidences, class_ids):
        B = pred_poses.shape[0]
        N = pred_confidences.shape[1]
        tb = 64 if B >= 64 else 8                      # B-tile, always a multiple of 8
        B_pad = ((B + tb - 1) // tb) * tb
        N_pad = ((N + 127) // 128) * 128

        cid = class_ids.astype(jnp.int32)
        class_idx = jnp.take(self.class_to_idx, cid)          # model row per sample
        has_model = jnp.take(self.class_has_model, cid)       # 1 -> ADD, 0 -> fallback
        counts = jnp.take(self.class_counts, cid)

        # one packed (B, 16) input: [tp(3), qp(4), tg(3), qg(4), has_model, cnt]
        packed = jnp.concatenate(
            [pred_poses.astype(jnp.float32), gt_poses.astype(jnp.float32),
             has_model[:, None], counts[:, None]], axis=1)

        if B_pad > B:
            pad_rows = jnp.zeros((B_pad - B, 16), jnp.float32).at[:, 15].set(1.0)
            packed = jnp.concatenate([packed, pad_rows], axis=0)
            class_idx = jnp.concatenate(
                [class_idx, jnp.zeros((B_pad - B,), jnp.int32)], axis=0)

        conf = pred_confidences.astype(jnp.float32)
        if B_pad > B or N_pad > N:
            conf = jnp.zeros((B_pad, N_pad), jnp.float32).at[:B, :N].set(conf)

        out = fused_densefusion_loss(
            class_idx, self.verts_all, packed, conf,
            add_weight=self.add_weight, conf_weight=self.conf_weight,
            b_real=B, n_real=N, tb=tb)
        return out[0], out[1], out[2]

    def __call__(self, pred_poses, gt_poses, pred_confidences, class_ids):
        total, avg_add, conf = self._jit_loss(pred_poses, gt_poses,
                                              pred_confidences, class_ids)
        # device scalars (no float() host syncs); call .item() outside jit if needed
        loss_dict = {'total_loss': total, 'add_loss': avg_add, 'conf_loss': conf}
        # TODO(synk): the PyTorch module's host-side stats tracking (.item()
        # accumulation) is intentionally omitted to keep the loss jittable.
        return total, loss_dict


# --------------------------------------------------------------------------
# pure-JAX reference (for verification)
# --------------------------------------------------------------------------
def _quat_to_mat_ref(q):
    w, x, y, z = q[0], q[1], q[2], q[3]
    return jnp.array([
        [1 - 2 * (y * y + z * z), 2 * (x * y - w * z), 2 * (x * z + w * y)],
        [2 * (x * y + w * z), 1 - 2 * (x * x + z * z), 2 * (y * z - w * x)],
        [2 * (x * z - w * y), 2 * (y * z + w * x), 1 - 2 * (x * x + y * y)],
    ], dtype=jnp.float32)


def _reference_loss(object_models, pred_poses, gt_poses, pred_conf, class_ids,
                    add_weight=1.0, conf_weight=0.1):
    B = pred_poses.shape[0]
    losses = []
    for i in range(B):
        cid = int(class_ids[i])
        pp, gp = pred_poses[i], gt_poses[i]
        if cid in object_models and np.asarray(object_models[cid]['vertices_raw']).shape[0] >= 10:
            v = jnp.asarray(object_models[cid]['vertices_raw'], dtype=jnp.float32)
            Rp = _quat_to_mat_ref(pp[3:]); Rg = _quat_to_mat_ref(gp[3:])
            pts_p = v @ Rp.T + pp[:3]
            pts_g = v @ Rg.T + gp[:3]
            losses.append(jnp.mean(jnp.linalg.norm(pts_p - pts_g, axis=1)))
        else:
            trans = jnp.mean(jnp.abs(pp[:3] - gp[:3]))
            quat = 1.0 - jnp.abs(jnp.sum(pp[3:] * gp[3:]))
            losses.append(trans + quat)
    avg_add = jnp.mean(jnp.stack(losses))
    x = pred_conf
    conf = jnp.mean(jnp.maximum(x, 0.0) - x + jnp.log1p(jnp.exp(-jnp.abs(x))))
    return add_weight * avg_add + conf_weight * conf


# --------------------------------------------------------------------------
# main
# --------------------------------------------------------------------------
if __name__ == "__main__":
    key = jax.random.PRNGKey(0)
    B, V, N_CONF = 4, 128, 128

    # deterministic synthetic object models: classes 0, 1, 2 have V vertices each
    k_models, k_tp, k_qp, k_tg, k_qg, k_conf = jax.random.split(key, 6)
    object_models = {}
    mk = jax.random.split(k_models, 3)
    for m in range(3):
        verts = 0.05 * jax.random.normal(mk[m], (V, 3), dtype=jnp.float32)
        object_models[m] = {'vertices_raw': np.asarray(verts)}

    # class ids: last one (7) has no model -> exercises the fallback path
    class_ids = jnp.array([0, 1, 2, 7], dtype=jnp.int32)

    def rand_poses(kt, kq):
        t = 0.1 * jax.random.normal(kt, (B, 3), dtype=jnp.float32)
        q = jax.random.normal(kq, (B, 4), dtype=jnp.float32)
        q = q / jnp.linalg.norm(q, axis=-1, keepdims=True)
        return jnp.concatenate([t, q], axis=-1)          # [tx,ty,tz,qw,qx,qy,qz]

    pred_poses = rand_poses(k_tp, k_qp)
    gt_poses = rand_poses(k_tg, k_qg)
    pred_confidences = jax.random.normal(k_conf, (B, N_CONF), dtype=jnp.float32)

    loss_fn = DenseFusionLossPallas(object_models, config=None,
                                    add_weight=1.0, conf_weight=0.1)
    total_loss, loss_dict = loss_fn(pred_poses, gt_poses, pred_confidences, class_ids)
    total_loss = jax.block_until_ready(total_loss)

    # verify against a pure-JAX reference of the PyTorch semantics
    ref = jax.block_until_ready(
        _reference_loss(object_models, pred_poses, gt_poses, pred_confidences,
                        np.asarray(class_ids)))
    np.testing.assert_allclose(np.asarray(total_loss), np.asarray(ref),
                               rtol=1e-4, atol=1e-5)

    print("KERNEL_OK")
</pallas_src>

<mosaic_0001>
module attributes {stable_mosaic.version = 11 : i64} {
  func.func @_fused_loss_kernel(%arg0: i32, %arg1: memref<8xi32, #tpu.memory_space<smem>>, %arg2: memref<3x3x128xf32, #tpu.memory_space<vmem>>, %arg3: memref<8x16xf32, #tpu.memory_space<vmem>>, %arg4: memref<8x128xf32, #tpu.memory_space<vmem>>, %arg5: memref<3xf32, #tpu.memory_space<smem>>, %arg6: memref<8x3x128xf32, #tpu.memory_space<vmem>>, %arg7: memref<2xf32, #tpu.memory_space<smem>>) attributes {dimension_semantics = [#tpu.dimension_semantics<arbitrary>], iteration_bounds = array<i64: 1>, scalar_prefetch = 1 : i64, scratch_operands = 2 : i64, tpu.core_type = #tpu.core_type<tc>, window_params = [{pipeline_mode = #tpu.pipeline_mode<synchronous>, transform_indices = @transform_0, window_bounds = array<i64: 3, 3, 128>}, {transform_indices = @transform_1, window_bounds = array<i64: 8, 16>}, {transform_indices = @transform_2, window_bounds = array<i64: 8, 128>}, {transform_indices = @transform_3, window_bounds = array<i64: 3>}]} {
    %c0_i32 = arith.constant 0 : i32
    %0 = arith.cmpi eq, %arg0, %c0_i32 : i32
    %1 = arith.extui %0 : i1 to i32
    %c0_i32_0 = arith.constant 0 : i32
    %2 = arith.cmpi ne, %1, %c0_i32_0 : i32
    scf.if %2 {
      %cst_73 = arith.constant 0.000000e+00 : f32
      %c0_74 = arith.constant 0 : index
      %242 = memref.load %arg7[%c0_74] : memref<2xf32, #tpu.memory_space<smem>>
      memref.store %cst_73, %arg7[%c0_74] : memref<2xf32, #tpu.memory_space<smem>>
      %cst_75 = arith.constant 0.000000e+00 : f32
      %c1_76 = arith.constant 1 : index
      %243 = memref.load %arg7[%c1_76] : memref<2xf32, #tpu.memory_space<smem>>
      memref.store %cst_75, %arg7[%c1_76] : memref<2xf32, #tpu.memory_space<smem>>
    } else {
    }
    %c8_i32 = arith.constant 8 : i32
    %3 = arith.muli %arg0, %c8_i32 : i32
    %c0_i32_1 = arith.constant 0 : i32
    %c8_i32_2 = arith.constant 8 : i32
    %4 = arith.addi %c0_i32_1, %c8_i32_2 : i32
    %c1_i32 = arith.constant 1 : i32
    scf.for %arg8 = %c0_i32_1 to %4 step %c1_i32  : i32 {
      %c1_i32_73 = arith.constant 1 : i32
      %242 = arith.muli %arg8, %c1_i32_73 : i32
      %c0_i32_74 = arith.constant 0 : i32
      %243 = arith.addi %c0_i32_74, %242 : i32
      %244 = arith.addi %3, %243 : i32
      %245 = arith.index_cast %244 : i32 to index
      %246 = memref.load %arg1[%245] : memref<8xi32, #tpu.memory_space<smem>>
      %247 = arith.index_cast %246 : i32 to index
      %c0_75 = arith.constant 0 : index
      %c0_76 = arith.constant 0 : index
      %248 = vector.load %arg2[%247, %c0_75, %c0_76] : memref<3x3x128xf32, #tpu.memory_space<vmem>>, vector<1x3x128xf32>
      %249 = vector.shape_cast %248 : vector<1x3x128xf32> to vector<3x128xf32>
      %250 = arith.index_cast %243 : i32 to index
      %c0_77 = arith.constant 0 : index
      %c0_78 = arith.constant 0 : index
      %251 = vector.load %arg6[%250, %c0_77, %c0_78] : memref<8x3x128xf32, #tpu.memory_space<vmem>>, vector<1x3x128xf32>
      %252 = vector.shape_cast %251 : vector<1x3x128xf32> to vector<3x128xf32>
      %253 = vector.shape_cast %249 : vector<3x128xf32> to vector<1x3x128xf32>
      tpu.vector_store %arg6[%250, %c0_77, %c0_78], %253 {strides = array<i32>} : memref<8x3x128xf32, #tpu.memory_space<vmem>>, vector<1x3x128xf32>,
    }
    %c8_i32_3 = arith.constant 8 : i32
    %c0 = arith.constant 0 : index
    %c0_4 = arith.constant 0 : index
    %c0_5 = arith.constant 0 : index
    %5 = vector.load %arg6[%c0, %c0_4, %c0_5] : memref<8x3x128xf32, #tpu.memory_space<vmem>>, vector<8x3x128xf32>
    %6 = vector.extract_strided_slice %5 {offsets = [0, 0, 0], sizes = [8, 1, 128], strides = [1, 1, 1]} : vector<8x3x128xf32> to vector<8x1x128xf32>
    %7 = vector.shape_cast %6 : vector<8x1x128xf32> to vector<8x128xf32>
    %8 = vector.extract_strided_slice %5 {offsets = [0, 1, 0], sizes = [8, 1, 128], strides = [1, 1, 1]} : vector<8x3x128xf32> to vector<8x1x128xf32>
    %9 = vector.shape_cast %8 : vector<8x1x128xf32> to vector<8x128xf32>
    %10 = vector.extract_strided_slice %5 {offsets = [0, 2, 0], sizes = [8, 1, 128], strides = [1, 1, 1]} : vector<8x3x128xf32> to vector<8x1x128xf32>
    %11 = vector.shape_cast %10 : vector<8x1x128xf32> to vector<8x128xf32>
    %c0_6 = arith.constant 0 : index
    %c0_7 = arith.constant 0 : index
    %12 = vector.load %arg3[%c0_6, %c0_7] : memref<8x16xf32, #tpu.memory_space<vmem>>, vector<8x1xf32>
    %c0_8 = arith.constant 0 : index
    %c1 = arith.constant 1 : index
    %13 = vector.load %arg3[%c0_8, %c1] : memref<8x16xf32, #tpu.memory_space<vmem>>, vector<8x1xf32>
    %c0_9 = arith.constant 0 : index
    %c2 = arith.constant 2 : index
    %14 = vector.load %arg3[%c0_9, %c2] : memref<8x16xf32, #tpu.memory_space<vmem>>, vector<8x1xf32>
    %c0_10 = arith.constant 0 : index
    %c3 = arith.constant 3 : index
    %15 = vector.load %arg3[%c0_10, %c3] : memref<8x16xf32, #tpu.memory_space<vmem>>, vector<8x1xf32>
    %c0_11 = arith.constant 0 : index
    %c4 = arith.constant 4 : index
    %16 = vector.load %arg3[%c0_11, %c4] : memref<8x16xf32, #tpu.memory_space<vmem>>, vector<8x1xf32>
    %c0_12 = arith.constant 0 : index
    %c5 = arith.constant 5 : index
    %17 = vector.load %arg3[%c0_12, %c5] : memref<8x16xf32, #tpu.memory_space<vmem>>, vector<8x1xf32>
    %c0_13 = arith.constant 0 : index
    %c6 = arith.constant 6 : index
    %18 = vector.load %arg3[%c0_13, %c6] : memref<8x16xf32, #tpu.memory_space<vmem>>, vector<8x1xf32>
    %c0_14 = arith.constant 0 : index
    %c7 = arith.constant 7 : index
    %19 = vector.load %arg3[%c0_14, %c7] : memref<8x16xf32, #tpu.memory_space<vmem>>, vector<8x1xf32>
    %c0_15 = arith.constant 0 : index
    %c8 = arith.constant 8 : index
    %20 = vector.load %arg3[%c0_15, %c8] : memref<8x16xf32, #tpu.memory_space<vmem>>, vector<8x1xf32>
    %c0_16 = arith.constant 0 : index
    %c9 = arith.constant 9 : index
    %21 = vector.load %arg3[%c0_16, %c9] : memref<8x16xf32, #tpu.memory_space<vmem>>, vector<8x1xf32>
    %c0_17 = arith.constant 0 : index
    %c10 = arith.constant 10 : index
    %22 = vector.load %arg3[%c0_17, %c10] : memref<8x16xf32, #tpu.memory_space<vmem>>, vector<8x1xf32>
    %c0_18 = arith.constant 0 : index
    %c11 = arith.constant 11 : index
    %23 = vector.load %arg3[%c0_18, %c11] : memref<8x16xf32, #tpu.memory_space<vmem>>, vector<8x1xf32>
    %c0_19 = arith.constant 0 : index
    %c12 = arith.constant 12 : index
    %24 = vector.load %arg3[%c0_19, %c12] : memref<8x16xf32, #tpu.memory_space<vmem>>, vector<8x1xf32>
    %c0_20 = arith.constant 0 : index
    %c13 = arith.constant 13 : index
    %25 = vector.load %arg3[%c0_20, %c13] : memref<8x16xf32, #tpu.memory_space<vmem>>, vector<8x1xf32>
    %c0_21 = arith.constant 0 : index
    %c14 = arith.constant 14 : index
    %26 = vector.load %arg3[%c0_21, %c14] : memref<8x16xf32, #tpu.memory_space<vmem>>, vector<8x1xf32>
    %c0_22 = arith.constant 0 : index
    %c15 = arith.constant 15 : index
    %27 = vector.load %arg3[%c0_22, %c15] : memref<8x16xf32, #tpu.memory_space<vmem>>, vector<8x1xf32>
    %28 = arith.mulf %16, %16 : vector<8x1xf32>
    %29 = arith.mulf %17, %17 : vector<8x1xf32>
    %30 = arith.mulf %18, %18 : vector<8x1xf32>
    %31 = arith.mulf %16, %17 : vector<8x1xf32>
    %32 = arith.mulf %16, %18 : vector<8x1xf32>
    %33 = arith.mulf %17, %18 : vector<8x1xf32>
    %34 = arith.mulf %15, %16 : vector<8x1xf32>
    %35 = arith.mulf %15, %17 : vector<8x1xf32>
    %36 = arith.mulf %15, %18 : vector<8x1xf32>
    %37 = arith.addf %29, %30 : vector<8x1xf32>
    %cst = arith.constant 2.000000e+00 : f32
    %38 = vector.broadcast %cst : f32 to vector<8x1xf32>
    %39 = arith.mulf %38, %37 : vector<8x1xf32>
    %cst_23 = arith.constant 1.000000e+00 : f32
    %40 = vector.broadcast %cst_23 : f32 to vector<8x1xf32>
    %41 = arith.subf %40, %39 : vector<8x1xf32>
    %42 = arith.subf %31, %36 : vector<8x1xf32>
    %cst_24 = arith.constant 2.000000e+00 : f32
    %43 = vector.broadcast %cst_24 : f32 to vector<8x1xf32>
    %44 = arith.mulf %43, %42 : vector<8x1xf32>
    %45 = arith.addf %32, %35 : vector<8x1xf32>
    %cst_25 = arith.constant 2.000000e+00 : f32
    %46 = vector.broadcast %cst_25 : f32 to vector<8x1xf32>
    %47 = arith.mulf %46, %45 : vector<8x1xf32>
    %48 = arith.addf %31, %36 : vector<8x1xf32>
    %cst_26 = arith.constant 2.000000e+00 : f32
    %49 = vector.broadcast %cst_26 : f32 to vector<8x1xf32>
    %50 = arith.mulf %49, %48 : vector<8x1xf32>
    %51 = arith.addf %28, %30 : vector<8x1xf32>
    %cst_27 = arith.constant 2.000000e+00 : f32
    %52 = vector.broadcast %cst_27 : f32 to vector<8x1xf32>
    %53 = arith.mulf %52, %51 : vector<8x1xf32>
    %cst_28 = arith.constant 1.000000e+00 : f32
    %54 = vector.broadcast %cst_28 : f32 to vector<8x1xf32>
    %55 = arith.subf %54, %53 : vector<8x1xf32>
    %56 = arith.subf %33, %34 : vector<8x1xf32>
    %cst_29 = arith.constant 2.000000e+00 : f32
    %57 = vector.broadcast %cst_29 : f32 to vector<8x1xf32>
    %58 = arith.mulf %57, %56 : vector<8x1xf32>
    %59 = arith.subf %32, %35 : vector<8x1xf32>
    %cst_30 = arith.constant 2.000000e+00 : f32
    %60 = vector.broadcast %cst_30 : f32 to vector<8x1xf32>
    %61 = arith.mulf %60, %59 : vector<8x1xf32>
    %62 = arith.addf %33, %34 : vector<8x1xf32>
    %cst_31 = arith.constant 2.000000e+00 : f32
    %63 = vector.broadcast %cst_31 : f32 to vector<8x1xf32>
    %64 = arith.mulf %63, %62 : vector<8x1xf32>
    %65 = arith.addf %28, %29 : vector<8x1xf32>
    %cst_32 = arith.constant 2.000000e+00 : f32
    %66 = vector.broadcast %cst_32 : f32 to vector<8x1xf32>
    %67 = arith.mulf %66, %65 : vector<8x1xf32>
    %cst_33 = arith.constant 1.000000e+00 : f32
    %68 = vector.broadcast %cst_33 : f32 to vector<8x1xf32>
    %69 = arith.subf %68, %67 : vector<8x1xf32>
    %70 = arith.mulf %23, %23 : vector<8x1xf32>
    %71 = arith.mulf %24, %24 : vector<8x1xf32>
    %72 = arith.mulf %25, %25 : vector<8x1xf32>
    %73 = arith.mulf %23, %24 : vector<8x1xf32>
    %74 = arith.mulf %23, %25 : vector<8x1xf32>
    %75 = arith.mulf %24, %25 : vector<8x1xf32>
    %76 = arith.mulf %22, %23 : vector<8x1xf32>
    %77 = arith.mulf %22, %24 : vector<8x1xf32>
    %78 = arith.mulf %22, %25 : vector<8x1xf32>
    %79 = arith.addf %71, %72 : vector<8x1xf32>
    %cst_34 = arith.constant 2.000000e+00 : f32
    %80 = vector.broadcast %cst_34 : f32 to vector<8x1xf32>
    %81 = arith.mulf %80, %79 : vector<8x1xf32>
    %cst_35 = arith.constant 1.000000e+00 : f32
    %82 = vector.broadcast %cst_35 : f32 to vector<8x1xf32>
    %83 = arith.subf %82, %81 : vector<8x1xf32>
    %84 = arith.subf %73, %78 : vector<8x1xf32>
    %cst_36 = arith.constant 2.000000e+00 : f32
    %85 = vector.broadcast %cst_36 : f32 to vector<8x1xf32>
    %86 = arith.mulf %85, %84 : vector<8x1xf32>
    %87 = arith.addf %74, %77 : vector<8x1xf32>
    %cst_37 = arith.constant 2.000000e+00 : f32
    %88 = vector.broadcast %cst_37 : f32 to vector<8x1xf32>
    %89 = arith.mulf %88, %87 : vector<8x1xf32>
    %90 = arith.addf %73, %78 : vector<8x1xf32>
    %cst_38 = arith.constant 2.000000e+00 : f32
    %91 = vector.broadcast %cst_38 : f32 to vector<8x1xf32>
    %92 = arith.mulf %91, %90 : vector<8x1xf32>
    %93 = arith.addf %70, %72 : vector<8x1xf32>
    %cst_39 = arith.constant 2.000000e+00 : f32
    %94 = vector.broadcast %cst_39 : f32 to vector<8x1xf32>
    %95 = arith.mulf %94, %93 : vector<8x1xf32>
    %cst_40 = arith.constant 1.000000e+00 : f32
    %96 = vector.broadcast %cst_40 : f32 to vector<8x1xf32>
    %97 = arith.subf %96, %95 : vector<8x1xf32>
    %98 = arith.subf %75, %76 : vector<8x1xf32>
    %cst_41 = arith.constant 2.000000e+00 : f32
    %99 = vector.broadcast %cst_41 : f32 to vector<8x1xf32>
    %100 = arith.mulf %99, %98 : vector<8x1xf32>
    %101 = arith.subf %74, %77 : vector<8x1xf32>
    %cst_42 = arith.constant 2.000000e+00 : f32
    %102 = vector.broadcast %cst_42 : f32 to vector<8x1xf32>
    %103 = arith.mulf %102, %101 : vector<8x1xf32>
    %104 = arith.addf %75, %76 : vector<8x1xf32>
    %cst_43 = arith.constant 2.000000e+00 : f32
    %105 = vector.broadcast %cst_43 : f32 to vector<8x1xf32>
    %106 = arith.mulf %105, %104 : vector<8x1xf32>
    %107 = arith.addf %70, %71 : vector<8x1xf32>
    %cst_44 = arith.constant 2.000000e+00 : f32
    %108 = vector.broadcast %cst_44 : f32 to vector<8x1xf32>
    %109 = arith.mulf %108, %107 : vector<8x1xf32>
    %cst_45 = arith.constant 1.000000e+00 : f32
    %110 = vector.broadcast %cst_45 : f32 to vector<8x1xf32>
    %111 = arith.subf %110, %109 : vector<8x1xf32>
    %112 = arith.subf %12, %19 : vector<8x1xf32>
    %113 = arith.subf %13, %20 : vector<8x1xf32>
    %114 = arith.subf %14, %21 : vector<8x1xf32>
    %115 = arith.subf %41, %83 : vector<8x1xf32>
    %116 = vector.broadcast %115 : vector<8x1xf32> to vector<8x128xf32>
    %117 = arith.mulf %116, %7 : vector<8x128xf32>
    %118 = arith.subf %44, %86 : vector<8x1xf32>
    %119 = vector.broadcast %118 : vector<8x1xf32> to vector<8x128xf32>
    %120 = arith.mulf %119, %9 : vector<8x128xf32>
    %121 = arith.addf %117, %120 : vector<8x128xf32>
    %122 = arith.subf %47, %89 : vector<8x1xf32>
    %123 = vector.broadcast %122 : vector<8x1xf32> to vector<8x128xf32>
    %124 = arith.mulf %123, %11 : vector<8x128xf32>
    %125 = arith.addf %121, %124 : vector<8x128xf32>
    %126 = vector.broadcast %112 : vector<8x1xf32> to vector<8x128xf32>
    %127 = arith.addf %125, %126 : vector<8x128xf32>
    %128 = arith.subf %50, %92 : vector<8x1xf32>
    %129 = vector.broadcast %128 : vector<8x1xf32> to vector<8x128xf32>
    %130 = arith.mulf %129, %7 : vector<8x128xf32>
    %131 = arith.subf %55, %97 : vector<8x1xf32>
    %132 = vector.broadcast %131 : vector<8x1xf32> to vector<8x128xf32>
    %133 = arith.mulf %132, %9 : vector<8x128xf32>
    %134 = arith.addf %130, %133 : vector<8x128xf32>
    %135 = arith.subf %58, %100 : vector<8x1xf32>
    %136 = vector.broadcast %135 : vector<8x1xf32> to vector<8x128xf32>
    %137 = arith.mulf %136, %11 : vector<8x128xf32>
    %138 = arith.addf %134, %137 : vector<8x128xf32>
    %139 = vector.broadcast %113 : vector<8x1xf32> to vector<8x128xf32>
    %140 = arith.addf %138, %139 : vector<8x128xf32>
    %141 = arith.subf %61, %103 : vector<8x1xf32>
    %142 = vector.broadcast %141 : vector<8x1xf32> to vector<8x128xf32>
    %143 = arith.mulf %142, %7 : vector<8x128xf32>
    %144 = arith.subf %64, %106 : vector<8x1xf32>
    %145 = vector.broadcast %144 : vector<8x1xf32> to vector<8x128xf32>
    %146 = arith.mulf %145, %9 : vector<8x128xf32>
    %147 = arith.addf %143, %146 : vector<8x128xf32>
    %148 = arith.subf %69, %111 : vector<8x1xf32>
    %149 = vector.broadcast %148 : vector<8x1xf32> to vector<8x128xf32>
    %150 = arith.mulf %149, %11 : vector<8x128xf32>
    %151 = arith.addf %147, %150 : vector<8x128xf32>
    %152 = vector.broadcast %114 : vector<8x1xf32> to vector<8x128xf32>
    %153 = arith.addf %151, %152 : vector<8x128xf32>
    %154 = arith.mulf %127, %127 : vector<8x128xf32>
    %155 = arith.mulf %140, %140 : vector<8x128xf32>
    %156 = arith.addf %154, %155 : vector<8x128xf32>
    %157 = arith.mulf %153, %153 : vector<8x128xf32>
    %158 = arith.addf %156, %157 : vector<8x128xf32>
    %159 = math.sqrt %158 : vector<8x128xf32>
    %160 = tpu.iota {dimensions = array<i32: 1>} : vector<8x128xi32>
    %161 = arith.fptosi %27 : vector<8x1xf32> to vector<8x1xi32>
    %162 = vector.broadcast %161 : vector<8x1xi32> to vector<8x128xi32>
    %163 = arith.cmpi slt, %160, %162 : vector<8x128xi32>
    %cst_46 = arith.constant 0.000000e+00 : f32
    %164 = vector.broadcast %cst_46 : f32 to vector<8x128xf32>
    %165 = arith.select %163, %159, %164 : vector<8x128xi1>, vector<8x128xf32>
    %cst_47 = arith.constant dense<0.000000e+00> : vector<8xf32>
    %166 = vector.multi_reduction <add>, %165, %cst_47 [1] : vector<8x128xf32> to vector<8xf32>
    %167 = vector.shape_cast %166 : vector<8xf32> to vector<8x1xf32>
    %168 = arith.divf %167, %27 : vector<8x1xf32>
    %169 = math.absf %112 : vector<8x1xf32>
    %170 = math.absf %113 : vector<8x1xf32>
    %171 = arith.addf %169, %170 : vector<8x1xf32>
    %172 = math.absf %114 : vector<8x1xf32>
    %173 = arith.addf %171, %172 : vector<8x1xf32>
    %cst_48 = arith.constant 0.333333343 : f32
    %174 = vector.broadcast %cst_48 : f32 to vector<8x1xf32>
    %175 = arith.mulf %173, %174 : vector<8x1xf32>
    %176 = arith.mulf %15, %22 : vector<8x1xf32>
    %177 = arith.mulf %16, %23 : vector<8x1xf32>
    %178 = arith.addf %176, %177 : vector<8x1xf32>
    %179 = arith.mulf %17, %24 : vector<8x1xf32>
    %180 = arith.addf %178, %179 : vector<8x1xf32>
    %181 = arith.mulf %18, %25 : vector<8x1xf32>
    %182 = arith.addf %180, %181 : vector<8x1xf32>
    %183 = math.absf %182 : vector<8x1xf32>
    %cst_49 = arith.constant 1.000000e+00 : f32
    %184 = vector.broadcast %cst_49 : f32 to vector<8x1xf32>
    %185 = arith.subf %184, %183 : vector<8x1xf32>
    %186 = arith.addf %175, %185 : vector<8x1xf32>
    %cst_50 = arith.constant 5.000000e-01 : f32
    %187 = vector.broadcast %cst_50 : f32 to vector<8x1xf32>
    %188 = arith.cmpf ogt, %26, %187 : vector<8x1xf32>
    %189 = arith.select %188, %168, %186 : vector<8x1xi1>, vector<8x1xf32>
    %190 = tpu.iota {dimensions = array<i32: 0>} : vector<8x1xi32>
    %191 = vector.broadcast %3 : i32 to vector<8x1xi32>
    %192 = arith.addi %190, %191 : vector<8x1xi32>
    %c4_i32 = arith.constant 4 : i32
    %193 = vector.broadcast %c4_i32 : i32 to vector<8x1xi32>
    %194 = arith.cmpi slt, %192, %193 : vector<8x1xi32>
    %cst_51 = arith.constant 0.000000e+00 : f32
    %195 = vector.broadcast %cst_51 : f32 to vector<8x1xf32>
    %196 = arith.select %194, %189, %195 : vector<8x1xi1>, vector<8x1xf32>
    %197 = vector.shape_cast %196 : vector<8x1xf32> to vector<1x8x1xf32>
    %cst_52 = arith.constant dense<0.000000e+00> : vector<1xf32>
    %198 = vector.multi_reduction <add>, %197, %cst_52 [1, 2] : vector<1x8x1xf32> to vector<1xf32>
    %199 = vector.shape_cast %198 : vector<1xf32> to vector<1x1x1xf32>
    %200 = vector.extract %199[0, 0, 0] : f32 from vector<1x1x1xf32>
    %c0_53 = arith.constant 0 : index
    %c0_54 = arith.constant 0 : index
    %201 = vector.load %arg4[%c0_53, %c0_54] : memref<8x128xf32, #tpu.memory_space<vmem>>, vector<8x128xf32>
    %cst_55 = arith.constant 0.000000e+00 : f32
    %202 = vector.broadcast %cst_55 : f32 to vector<8x128xf32>
    %203 = arith.maximumf %201, %202 : vector<8x128xf32>
    %204 = arith.subf %203, %201 : vector<8x128xf32>
    %205 = math.absf %201 : vector<8x128xf32>
    %cst_56 = arith.constant 0.000000e+00 : f32
    %206 = vector.broadcast %cst_56 : f32 to vector<8x128xf32>
    %207 = arith.subf %206, %205 : vector<8x128xf32>
    %208 = math.exp %207 : vector<8x128xf32>
    %209 = math.log1p %208 : vector<8x128xf32>
    %210 = arith.addf %204, %209 : vector<8x128xf32>
    %211 = tpu.iota {dimensions = array<i32: 1>} : vector<8x128xi32>
    %212 = tpu.iota {dimensions = array<i32: 0>} : vector<8x128xi32>
    %213 = vector.broadcast %3 : i32 to vector<8x128xi32>
    %214 = arith.addi %212, %213 : vector<8x128xi32>
    %c128_i32 = arith.constant 128 : i32
    %215 = vector.broadcast %c128_i32 : i32 to vector<8x128xi32>
    %216 = arith.cmpi slt, %211, %215 : vector<8x128xi32>
    %c4_i32_57 = arith.constant 4 : i32
    %217 = vector.broadcast %c4_i32_57 : i32 to vector<8x128xi32>
    %218 = arith.cmpi slt, %214, %217 : vector<8x128xi32>
    %219 = arith.andi %216, %218 : vector<8x128xi1>
    %cst_58 = arith.constant 0.000000e+00 : f32
    %220 = vector.broadcast %cst_58 : f32 to vector<8x128xf32>
    %221 = arith.select %219, %210, %220 : vector<8x128xi1>, vector<8x128xf32>
    %222 = vector.shape_cast %221 : vector<8x128xf32> to vector<1x8x128xf32>
    %cst_59 = arith.constant dense<0.000000e+00> : vector<1xf32>
    %223 = vector.multi_reduction <add>, %222, %cst_59 [1, 2] : vector<1x8x128xf32> to vector<1xf32>
    %224 = vector.shape_cast %223 : vector<1xf32> to vector<1x1x1xf32>
    %225 = vector.extract %224[0, 0, 0] : f32 from vector<1x1x1xf32>
    %c0_60 = arith.constant 0 : index
    %226 = memref.load %arg7[%c0_60] : memref<2xf32, #tpu.memory_space<smem>>
    %227 = arith.addf %226, %200 : f32
    %c0_61 = arith.constant 0 : index
    %228 = memref.load %arg7[%c0_61] : memref<2xf32, #tpu.memory_space<smem>>
    memref.store %227, %arg7[%c0_61] : memref<2xf32, #tpu.memory_space<smem>>
    %c1_62 = arith.constant 1 : index
    %229 = memref.load %arg7[%c1_62] : memref<2xf32, #tpu.memory_space<smem>>
    %230 = arith.addf %229, %225 : f32
    %c1_63 = arith.constant 1 : index
    %231 = memref.load %arg7[%c1_63] : memref<2xf32, #tpu.memory_space<smem>>
    memref.store %230, %arg7[%c1_63] : memref<2xf32, #tpu.memory_space<smem>>
    %c0_64 = arith.constant 0 : index
    %232 = memref.load %arg7[%c0_64] : memref<2xf32, #tpu.memory_space<smem>>
    %cst_65 = arith.constant 2.500000e-01 : f32
    %233 = arith.mulf %232, %cst_65 : f32
    %c1_66 = arith.constant 1 : index
    %234 = memref.load %arg7[%c1_66] : memref<2xf32, #tpu.memory_space<smem>>
    %cst_67 = arith.constant 0.001953125 : f32
    %235 = arith.mulf %234, %cst_67 : f32
    %cst_68 = arith.constant 1.000000e+00 : f32
    %236 = arith.mulf %cst_68, %233 : f32
    %cst_69 = arith.constant 1.000000e-01 : f32
    %237 = arith.mulf %cst_69, %235 : f32
    %238 = arith.addf %236, %237 : f32
    %c0_70 = arith.constant 0 : index
    %239 = memref.load %arg5[%c0_70] : memref<3xf32, #tpu.memory_space<smem>>
    memref.store %238, %arg5[%c0_70] : memref<3xf32, #tpu.memory_space<smem>>
    %c1_71 = arith.constant 1 : index
    %240 = memref.load %arg5[%c1_71] : memref<3xf32, #tpu.memory_space<smem>>
    memref.store %233, %arg5[%c1_71] : memref<3xf32, #tpu.memory_space<smem>>
    %c2_72 = arith.constant 2 : index
    %241 = memref.load %arg5[%c2_72] : memref<3xf32, #tpu.memory_space<smem>>
    memref.store %235, %arg5[%c2_72] : memref<3xf32, #tpu.memory_space<smem>>
    return
  }
  func.func @transform_0(%arg0: i32, %arg1: memref<8xi32, #tpu.memory_space<smem>>) -> (i32, i32, i32) {
    %c0_i32 = arith.constant 0 : i32
    %c0_i32_0 = arith.constant 0 : i32
    %c0_i32_1 = arith.constant 0 : i32
    %c0_i32_2 = arith.constant 0 : i32
    return %c0_i32, %c0_i32_0, %c0_i32_1 : i32, i32, i32
  }
  func.func @transform_1(%arg0: i32, %arg1: memref<8xi32, #tpu.memory_space<smem>>) -> (i32, i32) {
    %c0_i32 = arith.constant 0 : i32
    %c0_i32_0 = arith.constant 0 : i32
    return %arg0, %c0_i32 : i32, i32
  }
  func.func @transform_2(%arg0: i32, %arg1: memref<8xi32, #tpu.memory_space<smem>>) -> (i32, i32) {
    %c0_i32 = arith.constant 0 : i32
    %c0_i32_0 = arith.constant 0 : i32
    return %arg0, %c0_i32 : i32, i32
  }
  func.func @transform_3(%arg0: i32, %arg1: memref<8xi32, #tpu.memory_space<smem>>) -> i32 {
    %c0_i32 = arith.constant 0 : i32
    %c0_i32_0 = arith.constant 0 : i32
    return %c0_i32 : i32
  }
}

</mosaic_0001>

<llo_original>
// kernel: _loss.1
$region0: #{_loss.1}
  #allocation0 [shape = 'u32[]', space=smem, size = 0x4, offset = 0x4, fixed_abs, tag = 'smem constant byte address 0x4 - core index']
  #allocation1 [shape = 'u32[144,128]{1,0:T(1,128)}', space=vmem, size = 0x12000, scoped, tag = 'internal scratch']
  #allocation2 [shape = 'f32[8,3,128]{2,1,0:T(4,128)}', space=vmem, size = 0x4000, scoped, tag = 'scratch operand']
  #allocation3 [shape = 'f32[2]{0:T(128)}', space=smem, size = 0x200, scoped, tag = 'scratch operand']
  #allocation4 [shape = 's32[1]{0}', space=sflag, size = 0x4, scoped, tag = 'scoped memory for _loss.1']
  #allocation5 [shape = 'u8[512]{0}', space=smem, size = 0x200, scoped, tag = 'prefetched SMEM operand 0']
  %s0 = inlined_call_operand.vmem [shape: s32[8], index: 0, kind: input, shape index: {}]
  %s1 = inlined_call_operand.vmem [shape: f32[3,3,128], index: 1, kind: input, shape index: {}]
  %s2 = inlined_call_operand.vmem [shape: f32[8,16], index: 2, kind: input, shape index: {}]
  %s3 = inlined_call_operand.vmem [shape: f32[8,128], index: 3, kind: input, shape index: {}]
  %s4 = inlined_call_operand.vmem [shape: f32[3], index: 4, kind: output, shape index: {}]
  %s5 = sld [smem:[#allocation0]]
  $region33: #{_loss.1} parent=0
    _
  %s7 = ssub.s32 1, %s5
  %s8 = scalar_select 0, %s7, %s5
  %s9 = sshll.u32 %s0, 4
  %s10 = int_to_ptr.vmem [resolvable:$true] %s9
  %12 = dma.vmem_to_smem %s10, 16, [#allocation5], [#allocation4]
  %13 = dma.done [#allocation4], 16
  %14 = sfence
  $region1: #{_loss.1} parent=0
    #allocation6 [shape = 'u8[512]{0}', space=smem, size = 0x200, scoped, tag = 'output window, operand 0, single buffered']
    #allocation7 [shape = 's32[1]{0}', space=sflag, size = 0x4, scoped, tag = 'scoped memory for _loss.1']
    %15 = vsyncpa [#allocation7], 0
    // Predicated region
    $region2: #{_loss.1} parent=1 // pred_check
      _
    $region3: #{_loss.1} parent=1 // pred_check_branch
      %17 = sbr.rel (0) target = $region5
    $region4: #{_loss.1} parent=1 // pred_region
      _
    $region5: #{_loss.1} parent=1 // pred_fallthru
      _
    // Predicated region
    $region6: #{_loss.1} parent=1 // pred_check
      _
    $region7: #{_loss.1} parent=1 // pred_check_branch
      %19 = sbr.rel (0) target = $region9
    $region8: #{_loss.1} parent=1 // pred_region
      _
    $region9: #{_loss.1} parent=1 // pred_fallthru
      _
    // Predicated region
    $region10: #{_loss.1} parent=1 // pred_check
      _
    $region11: #{_loss.1} parent=1 // pred_check_branch
      %21 = sbr.rel (0) target = $region13
    $region12: #{_loss.1} parent=1 // pred_region
      _
    $region13: #{_loss.1} parent=1 // pred_fallthru
      _
    %p22 = scmp.eq.s32.totalorder 0, 0
    // Predicated region
    $region14: #{_loss.1} parent=1 // pred_check
      %p23 = pneg %p22
    $region15: #{_loss.1} parent=1 // pred_check_branch
      %25 = sbr.rel (%p23) target = $region17
    $region16: #{_loss.1} parent=1 // pred_region
      %s26 = scalar_lea.smem [#allocation3], 0
      %27 = sst [smem:[%s26]] 0.0
      %s28 = scalar_lea.smem [#allocation3], 1
      %29 = sst [smem:[%s28]] 0.0
    $region17: #{_loss.1} parent=1 // pred_fallthru
      _
    %s30 = smul.u32 0, 8
    loop: start=0, step=1, limit=8
    $region18: #{_loss.1} parent=1 // loop_pre_header
      _
    $region19: #{_loss.1} parent=1 // loop_header
      %s32 = sphi 0, %s36
      %p33 = scmp.ge.s32.totalorder %s32, 8
    $region20: #{_loss.1} parent=1 // loop_header_branch
      %35 = sbr.rel (%p33) target = $region24
    $region21: #{_loss.1} parent=1 // loop_body
      %s37 = sadd.s32 %s30, %s32
      %s38 = sld [smem:[#allocation5 + %s37]]
      %s39 = smul.u32 %s38, 4
      %s40 = scalar_lea.vmem %s1, %s39
      %v41 = vld [vmem:[%s40] sm:$0x7]
      %s42 = smul.u32 %s32, 4
      %s43 = scalar_lea.vmem [#allocation2], %s42
      %44 = vst [vmem:[%s43] sm:$0x7] %v41
    $region22: #{_loss.1} parent=1 // loop_footer
      %s36 = sadd.s32 1, %s32
    $region23: #{_loss.1} parent=1 // loop_footer_branch
      %31 = sbr.rel target = $region19
    $region24: #{_loss.1} parent=1 // loop_exit
      _
    %v45 = vld [vmem:[#allocation2] sm:$0x7]
    %v46 = vld [vmem:[#allocation2 + $0x4] sm:$0x7]
    %v47 = vld [vmem:[#allocation2 + $0x8] sm:$0x7]
    %v48 = vld [vmem:[#allocation2 + $0xc] sm:$0x7]
    %v49 = vld [vmem:[#allocation2 + $0x10] sm:$0x7]
    %v50 = vld [vmem:[#allocation2 + $0x14] sm:$0x7]
    %v51 = vld [vmem:[#allocation2 + $0x18] sm:$0x7]
    %v52 = vld [vmem:[#allocation2 + $0x1c] sm:$0x7]
    %v53 = vld [vmem:[%s2] sm:$0xff]
    %v54 = vmul.f32 %v53, %v53
    %56 = vrot.lane.b32.xlu0 %v53, 127
    %v57 = vpop.permute.xlu0 %56
    %v59 = vmul.f32 %v53, %v57
    %60 = vrot.lane.b32.xlu0 %v53, 126
    %v61 = vpop.permute.xlu0 %60
    %v63 = vmul.f32 %v53, %v61
    %64 = vrot.lane.b32.xlu0 %v53, 125
    %v65 = vpop.permute.xlu0 %64
    %v67 = vmul.f32 %v53, %v65
    %69 = vrot.lane.b32.xlu0 %v54, 127
    %v70 = vpop.permute.xlu0 %69
    %v72 = vadd.f32 %v54, %v70
    %v73 = vmul.f32 %v72, 2.0
    %v74 = vsub.f32 1.0, %v73
    %76 = vrot.lane.b32.xlu0 %v67, 1
    %v77 = vpop.permute.xlu0 %76
    %v79 = vsub.f32 %v59, %v77
    %v80 = vmul.f32 %v79, 2.0
    %82 = vrot.lane.b32.xlu0 %v63, 1
    %v83 = vpop.permute.xlu0 %82
    %v85 = vadd.f32 %v63, %v83
    %v86 = vmul.f32 %v85, 2.0
    %v87 = vadd.f32 %v59, %v77
    %v88 = vmul.f32 %v87, 2.0
    %89 = vrot.lane.b32.xlu0 %v54, 126
    %v90 = vpop.permute.xlu0 %89
    %v92 = vadd.f32 %v54, %v90
    %v93 = vmul.f32 %v92, 2.0
    %v94 = vsub.f32 1.0, %v93
    %96 = vrot.lane.b32.xlu0 %v59, 2
    %v97 = vpop.permute.xlu0 %96
    %v99 = vsub.f32 %v59, %v97
    %v100 = vmul.f32 %v99, 2.0
    %v101 = vsub.f32 %v63, %v83
    %v102 = vmul.f32 %v101, 2.0
    %v103 = vadd.f32 %v59, %v97
    %v104 = vmul.f32 %v103, 2.0
    %105 = vrot.lane.b32.xlu0 %v53, 121
    %v106 = vpop.permute.xlu0 %105
    %v108 = vsub.f32 %v53, %v106
    %110 = vrot.lane.b32.xlu0 %v74, 121
    %v111 = vpop.permute.xlu0 %110
    %v113 = vsub.f32 %v74, %v111
    %115 = vset.pattern.permute.xlu0 5
    %116 = vperm.xlu0 %115, %v113
    %v117 = vpop.permute.xlu0 %116
    %v127 = vrot.slane %v46, 7
    %vm128 = vcmask 1041409
    %v129 = vsel %vm128, %v127, %v45
    %v130 = vrot.slane %v47, 6
    %vm131 = vcmask 1042434
    %v132 = vsel %vm131, %v130, %v129
    %v133 = vrot.slane %v48, 5
    %vm134 = vcmask 1043459
    %v135 = vsel %vm134, %v133, %v132
    %v136 = vrot.slane %v49, 4
    %vm137 = vcmask 1044484
    %v138 = vsel %vm137, %v136, %v135
    %v139 = vrot.slane %v50, 3
    %vm140 = vcmask 1045509
    %v141 = vsel %vm140, %v139, %v138
    %v142 = vrot.slane %v51, 2
    %vm143 = vcmask 1046534
    %v144 = vsel %vm143, %v142, %v141
    %v145 = vrot.slane %v52, 1
    %vm146 = vcmask 1047559
    %v147 = vsel %vm146, %v145, %v144
    %v149 = vmul.f32 %v117, %v147
    %151 = vrot.lane.b32.xlu0 %v80, 121
    %v152 = vpop.permute.xlu0 %151
    %v154 = vsub.f32 %v80, %v152
    %156 = vset.pattern.permute.xlu0 4
    %157 = vperm.xlu0 %156, %v154
    %v158 = vpop.permute.xlu0 %157
    %v160 = vrot.slane %v45, 1
    %v161 = vsel %vm128, %v46, %v160
    %v162 = vrot.slane %v47, 7
    %v163 = vsel %vm131, %v162, %v161
    %v164 = vrot.slane %v48, 6
    %v165 = vsel %vm134, %v164, %v163
    %v166 = vrot.slane %v49, 5
    %v167 = vsel %vm137, %v166, %v165
    %v168 = vrot.slane %v50, 4
    %v169 = vsel %vm140, %v168, %v167
    %v170 = vrot.slane %v51, 3
    %v171 = vsel %vm143, %v170, %v169
    %v172 = vrot.slane %v52, 2
    %v173 = vsel %vm146, %v172, %v171
    %v175 = vmul.f32 %v158, %v173
    %v176 = vadd.f32 %v149, %v175
    %178 = vrot.lane.b32.xlu0 %v86, 121
    %v179 = vpop.permute.xlu0 %178
    %v181 = vsub.f32 %v86, %v179
    %183 = vset.pattern.permute.xlu0 4
    %184 = vperm.xlu0 %183, %v181
    %v185 = vpop.permute.xlu0 %184
    %v187 = vrot.slane %v45, 2
    %v188 = vrot.slane %v46, 1
    %v189 = vsel %vm128, %v188, %v187
    %v190 = vsel %vm131, %v47, %v189
    %v191 = vrot.slane %v48, 7
    %v192 = vsel %vm134, %v191, %v190
    %v193 = vrot.slane %v49, 6
    %v194 = vsel %vm137, %v193, %v192
    %v195 = vrot.slane %v50, 5
    %v196 = vsel %vm140, %v195, %v194
    %v197 = vrot.slane %v51, 4
    %v198 = vsel %vm143, %v197, %v196
    %v199 = vrot.slane %v52, 3
    %v200 = vsel %vm146, %v199, %v198
    %v202 = vmul.f32 %v185, %v200
    %v203 = vadd.f32 %v176, %v202
    %205 = vset.pattern.permute.xlu0 0
    %206 = vperm.xlu0 %205, %v108
    %v207 = vpop.permute.xlu0 %206
    %v209 = vadd.f32 %v203, %v207
    %211 = vrot.lane.b32.xlu0 %v88, 121
    %v212 = vpop.permute.xlu0 %211
    %v214 = vsub.f32 %v88, %v212
    %216 = vset.pattern.permute.xlu0 4
    %217 = vperm.xlu0 %216, %v214
    %v218 = vpop.permute.xlu0 %217
    %v220 = vmul.f32 %v218, %v147
    %222 = vrot.lane.b32.xlu0 %v94, 121
    %v223 = vpop.permute.xlu0 %222
    %v225 = vsub.f32 %v94, %v223
    %227 = vset.pattern.permute.xlu0 4
    %228 = vperm.xlu0 %227, %v225
    %v229 = vpop.permute.xlu0 %228
    %v231 = vmul.f32 %v229, %v173
    %v232 = vadd.f32 %v220, %v231
    %234 = vrot.lane.b32.xlu0 %v100, 121
    %v235 = vpop.permute.xlu0 %234
    %v237 = vsub.f32 %v100, %v235
    %239 = vset.pattern.permute.xlu0 5
    %240 = vperm.xlu0 %239, %v237
    %v241 = vpop.permute.xlu0 %240
    %v243 = vmul.f32 %v241, %v200
    %v244 = vadd.f32 %v232, %v243
    %245 = vset.pattern.permute.xlu0 1
    %246 = vperm.xlu0 %245, %v108
    %v247 = vpop.permute.xlu0 %246
    %v249 = vadd.f32 %v244, %v247
    %251 = vrot.lane.b32.xlu0 %v102, 121
    %v252 = vpop.permute.xlu0 %251
    %v254 = vsub.f32 %v102, %v252
    %256 = vset.pattern.permute.xlu0 4
    %257 = vperm.xlu0 %256, %v254
    %v258 = vpop.permute.xlu0 %257
    %v260 = vmul.f32 %v258, %v147
    %262 = vrot.lane.b32.xlu0 %v104, 121
    %v263 = vpop.permute.xlu0 %262
    %v265 = vsub.f32 %v104, %v263
    %267 = vset.pattern.permute.xlu0 5
    %268 = vperm.xlu0 %267, %v265
    %v269 = vpop.permute.xlu0 %268
    %v271 = vmul.f32 %v269, %v173
    %v272 = vadd.f32 %v260, %v271
    %273 = vset.pattern.permute.xlu0 4
    %274 = vperm.xlu0 %273, %v113
    %v275 = vpop.permute.xlu0 %274
    %v277 = vmul.f32 %v275, %v200
    %v278 = vadd.f32 %v272, %v277
    %279 = vset.pattern.permute.xlu0 2
    %280 = vperm.xlu0 %279, %v108
    %v281 = vpop.permute.xlu0 %280
    %v283 = vadd.f32 %v278, %v281
    %v284 = vmul.f32 %v209, %v209
    %v285 = vmul.f32 %v249, %v249
    %v286 = vadd.f32 %v284, %v285
    %v287 = vmul.f32 %v283, %v283
    %v288 = vadd.f32 %v286, %v287
    %v289 = vrsqrt.pop %v288
    %v290 = vmul.f32 %v288, %v289
    %vm291 = vcmp.eq.f32.partialorder %v288, inf
    %v292 = vsel %vm291, %v288, %v290
    %vm293 = vcmp.eq.f32.partialorder %v288, 0.0
    %v294 = vand.u32 %v288, 2147483648
    %v295 = vsel %vm293, %v294, %v292
    %v296 = vlaneseq
    %v297 = vand.u32 %v296, 127
    %v298 = vcvt.f32.s32.to.zero.pseudo %v53
    %299 = vset.pattern.permute.xlu0 15
    %300 = vperm.xlu0 %299, %v298
    %v301 = vpop.permute.xlu0 %300
    %vm302 = vcmp.lt.s32.totalorder %v297, %v301
    %v303 = vsel %vm302, %v295, 0.0
    %304 = vadd.xlane.f32.xlu0 %v303
    %v305 = vpop.xlane.xlu0 %304
    %v306 = vrcp.pop %v53
    %v307 = vmul.f32 %v305, %v306
    %v308 = vand.u32 2147483647, %v108
    %310 = vrot.lane.b32.xlu0 %v308, 127
    %v311 = vpop.permute.xlu0 %310
    %v313 = vadd.f32 %v308, %v311
    %314 = vrot.lane.b32.xlu0 %v308, 126
    %v315 = vpop.permute.xlu0 %314
    %v317 = vadd.f32 %v313, %v315
    %v318 = vmul.f32 %v317, 0.33333334
    %v319 = vmul.f32 %v53, %v106
    %321 = vrot.lane.b32.xlu0 %v319, 127
    %v322 = vpop.permute.xlu0 %321
    %v324 = vadd.f32 %v319, %v322
    %325 = vrot.lane.b32.xlu0 %v319, 126
    %v326 = vpop.permute.xlu0 %325
    %v328 = vadd.f32 %v324, %v326
    %329 = vrot.lane.b32.xlu0 %v319, 125
    %v330 = vpop.permute.xlu0 %329
    %v332 = vadd.f32 %v328, %v330
    %v333 = vand.u32 2147483647, %v332
    %v334 = vsub.f32 1.0, %v333
    %336 = vrot.lane.b32.xlu0 %v334, 125
    %v337 = vpop.permute.xlu0 %336
    %v339 = vadd.f32 %v318, %v337
    %vm340 = vcmp.gt.f32.partialorder %v53, 0.5
    %342 = vrot.lane.b32.xlu0 %v307, 127
    %v343 = vpop.permute.xlu0 %342
    %346 = vrot.lane.b32.xlu0 %v339, 14
    %v347 = vpop.permute.xlu0 %346
    %v349 = vsel %vm340, %v343, %v347
    %v350 = vlaneseq
    %v351 = vshrl.u32 %v350, 7
    %v352 = vstv %s30
    %v353 = vadd.s32 %v351, %v352
    %vm354 = vcmp.lt.s32.totalorder %v353, 4
    %v355 = vsel %vm354, %v349, 0.0
    %357 = vrot.lane.b32.xlu0 %v355, 114
    %v358 = vpop.permute.xlu0 %357
    %vm360 = vcmask 7168
    %v361 = vsel %vm360, %v358, 0.0
    %362 = vadd.xlane.f32.xlu0 %v361
    %v363 = vpop.xlane.xlu0 %362
    %v364 = vrot.slane %v363, 4
    %v365 = vadd.f32 %v363, %v364
    %v366 = vrot.slane %v365, 2
    %v367 = vadd.f32 %v365, %v366
    %v368 = vrot.slane %v367, 1
    %v369 = vadd.f32 %v367, %v368
    %s370 = vtos %v369
    %v371 = vld [vmem:[%s3] sm:$0xff]
    %v372 = vmax.f32 %v371, 0.0
    %v373 = vsub.f32 %v372, %v371
    %v374 = vand.u32 2147483647, %v371
    %v375 = vsub.f32 0.0, %v374
    %v376 = vmul.f32 %v375, 1.442695
    %v377 = vpow.pop %v376
    %v378 = vadd.f32 %v377, 1.0
    %v379 = vlog2.pop %v378
    %v380 = vmul.f32 %v379, 0.6931472
    %v381 = vmul.f32 -0.5, %v377
    %v382 = vadd.f32 %v381, 1.0
    %v383 = vmul.f32 %v382, %v377
    %v384 = vand.u32 2147483647, %v377
    %vm385 = vcmp.lt.f32.partialorder %v384, 0.0004427343
    %v386 = vsel %vm385, %v383, %v380
    %v387 = vadd.f32 %v373, %v386
    %vm388 = vcmp.lt.s32.totalorder %v297, 128
    %vm389 = vmand %vm388, %vm354
    %v390 = vsel %vm389, %v387, 0.0
    %391 = vadd.xlane.f32.xlu0 %v390
    %v392 = vpop.xlane.xlu0 %391
    %v393 = vrot.slane %v392, 4
    %v394 = vadd.f32 %v392, %v393
    %v395 = vrot.slane %v394, 2
    %v396 = vadd.f32 %v394, %v395
    %v397 = vrot.slane %v396, 1
    %v398 = vadd.f32 %v396, %v397
    %s399 = vtos %v398
    %s400 = sld [smem:[#allocation3]]
    %s401 = sadd.f32 %s400, %s370
    %s402 = scalar_lea.smem [#allocation3], 0
    %403 = sst [smem:[%s402]] %s401
    %s404 = sld [smem:[#allocation3 + $0x1]]
    %s405 = sadd.f32 %s404, %s399
    %s406 = scalar_lea.smem [#allocation3], 1
    %407 = sst [smem:[%s406]] %s405
    %s408 = sld [smem:[#allocation3]]
    %s409 = smul.f32 %s408, 0.25
    %s410 = sld [smem:[#allocation3 + $0x1]]
    %s411 = smul.f32 %s410, 0.001953125
    %s412 = smul.f32 %s411, 0.1
    %s413 = sadd.f32 %s409, %s412
    %s414 = scalar_lea.smem [#allocation6], 0
    %415 = sst [smem:[%s414]] %s413
    %s416 = scalar_lea.smem [#allocation6], 1
    %417 = sst [smem:[%s416]] %s409
    %s418 = scalar_lea.smem [#allocation6], 2
    %419 = sst [smem:[%s418]] %s411
    // Predicated region
    $region25: #{_loss.1} parent=1 // pred_check
      _
    $region26: #{_loss.1} parent=1 // pred_check_branch
      %421 = sbr.rel (0) target = $region28
    $region27: #{_loss.1} parent=1 // pred_region
      %s423 = ssub.s32 16, 16
      %424 = vsyncadd [#allocation7], %s423
      %s426 = sshll.u32 %s4, 4
      %s427 = int_to_ptr.vmem [resolvable:$true] %s426
      %429 = dma.smem_to_vmem [#allocation6], 16, %s427, [#allocation7]
    $region28: #{_loss.1} parent=1 // pred_fallthru
      _
    // Predicated region
    $region29: #{_loss.1} parent=1 // pred_check
      _
    $region30: #{_loss.1} parent=1 // pred_check_branch
      %431 = sbr.rel (0) target = $region32
    $region31: #{_loss.1} parent=1 // pred_region
      %432 = dma.done [#allocation7], 16
    $region32: #{_loss.1} parent=1 // pred_fallthru
      _
    %433 = sfence
    %434 = vsyncpa [#allocation7], 1

</llo_original>
